<compile_context>
chip_gen: v6e
topology: v6e:2x2x1
jax: 0.10.0
libtpu: 0.0.40
codegen_flags: <defaults>
</compile_context>

<pallas_src>
import math

import jax
import jax.numpy as jnp
from jax.experimental import pallas as pl
from jax.experimental.pallas import tpu as pltpu

# ------------------------------- config -------------------------------------
VOCAB = 100          # synthetic vocab
S = 8                # seq length (small analogue of MAX_SEQ_LEN=128)
H = 32               # bert hidden size
FFN_I = 64           # FFN intermediate size
LORA_R = 4
LORA_ALPHA = 8
LORA_SCALE = LORA_ALPHA / LORA_R
MLP_H1 = 128         # mlp_hidden_1
MLP_H2 = 64          # mlp_hidden_2
NUM_CLASSES = 3
LOGIT_PAD = 128      # lane-dense padded logits width (>= NUM_CLASSES)
LN_EPS = 1e-12
ATTN_SCALE = 1.0 / math.sqrt(H)   # single attention head of width H
CROSS_BATCH_NEG = -1.0e9          # exp() underflows to exactly 0.0 in f32

# ---- packed weight-slab column layout (no slice crosses a 128-lane tile) ----
W32_COLS = 3 * H + H + MLP_H1 + FFN_I          # 96 + 32 + 128 + 64 = 320
COL_QKV = 0                                    # [wq_eff | wk | wv_eff]  (96)
COL_WO = 3 * H                                 # 96  : wo      (32)
COL_MLP1 = 128                                 # 128 : mlp_w1  (128, tile-aligned)
COL_FFN1 = 256                                 # 256 : ffn_w1  (64, tile-aligned)

W64_COLS = LOGIT_PAD + H                       # 160  (relies on MLP_H2 == FFN_I == 64)
COL_MLP3 = 0                                   # 0   : mlp_w3 zero-padded to 128 lanes
COL_FFN2 = LOGIT_PAD                           # 128 : ffn_w2  (32, tile-aligned)

# ---- bias / LayerNorm row-slab layout: one (16,128) buffer, one row each ----
VEC_ROWS = 16
(ROW_EMB_G, ROW_EMB_B, ROW_BQKV, ROW_BO, ROW_LN1_G, ROW_LN1_B,
 ROW_BF1, ROW_BF2, ROW_LN2_G, ROW_LN2_B, ROW_MB1, ROW_MB2, ROW_MB3) = range(13)


# --------------------------- in-kernel helpers -------------------------------
def _layer_norm(x, gamma, beta):
    mu = jnp.mean(x, axis=-1, keepdims=True)
    var = jnp.mean((x - mu) ** 2, axis=-1, keepdims=True)
    return (x - mu) * jax.lax.rsqrt(var + LN_EPS) * gamma + beta


def _gelu(x):
    # TODO(synk): HF BERT 'gelu' is erf-based exact GELU; tanh approximation
    # used here (~1e-3-level difference).
    c = math.sqrt(2.0 / math.pi)
    return 0.5 * x * (1.0 + jnp.tanh(c * (x + 0.044715 * x * x * x)))


# --------------------------- fused forward kernel ----------------------------
def fused_forward_kernel(x_ref, bias_ref, w32_ref, w64_ref, w128_ref, vec_ref,
                         out_ref):
    # x_ref    : (B*S, H)    token + position + type embeddings (pre-LayerNorm)
    # bias_ref : (B*S, B*S)  block-diagonal attention bias (mask + cross-batch)
    # w32_ref  : (H, 320)    [ qkv | wo | mlp_w1 | ffn_w1 ]
    # w64_ref  : (64, 160)   [ mlp_w3 (padded to 128) | ffn_w2 ]
    # w128_ref : (128, 64)   mlp_w2
    # vec_ref  : (16, 128)   every bias / LayerNorm vector, one per row
    # out_ref  : (B*S, 128)  lane-dense padded logits for every token row
    vecs = vec_ref[...]

    def row(i, w):
        return vecs[i:i + 1, :w]                                  # (1, w)

    # ---- embedding LayerNorm ------------------------------------------------
    x = _layer_norm(x_ref[...], row(ROW_EMB_G, H), row(ROW_EMB_B, H))

    # ---- fused Q/K/V projection (LoRA pre-merged in wrapper) ----------------
    qkv = jnp.dot(x, w32_ref[:, COL_QKV:COL_QKV + 3 * H],
                  preferred_element_type=jnp.float32) + row(ROW_BQKV, 3 * H)
    q = qkv[:, 0:H]
    k = qkv[:, H:2 * H]
    v = qkv[:, 2 * H:3 * H]

    # ---- flattened single-head attention (block-diagonal via additive bias) -
    scores = jax.lax.dot_general(
        q, k, (((1,), (1,)), ((), ())),
        preferred_element_type=jnp.float32) * ATTN_SCALE          # (BS, BS)
    scores = scores + bias_ref[...]
    scores = scores - jnp.max(scores, axis=-1, keepdims=True)
    p = jnp.exp(scores)
    p = p * pl.reciprocal(jnp.sum(p, axis=-1, keepdims=True), approx=True)
    ctx = jnp.dot(p, v, preferred_element_type=jnp.float32)       # (BS, H)

    attn_out = jnp.dot(ctx, w32_ref[:, COL_WO:COL_WO + H],
                       preferred_element_type=jnp.float32) + row(ROW_BO, H)
    h1 = _layer_norm(x + attn_out, row(ROW_LN1_G, H), row(ROW_LN1_B, H))

    # ---- GELU FFN + residual LayerNorm --------------------------------------
    ffn_mid = _gelu(
        jnp.dot(h1, w32_ref[:, COL_FFN1:COL_FFN1 + FFN_I],
                preferred_element_type=jnp.float32) + row(ROW_BF1, FFN_I))
    ffn_out = jnp.dot(ffn_mid, w64_ref[:, COL_FFN2:COL_FFN2 + H],
                      preferred_element_type=jnp.float32) + row(ROW_BF2, H)
    h2 = _layer_norm(h1 + ffn_out, row(ROW_LN2_G, H), row(ROW_LN2_B, H))

    # ---- 3-layer MLP head on ALL rows (dropout = identity in eval) ----------
    # Running every token row through the head is free at this MXU utilization
    # and avoids the CLS sublane relayout; the wrapper picks rows 0, S, 2S, ...
    m1 = jnp.maximum(
        jnp.dot(h2, w32_ref[:, COL_MLP1:COL_MLP1 + MLP_H1],
                preferred_element_type=jnp.float32) + row(ROW_MB1, MLP_H1), 0.0)
    m2 = jnp.maximum(
        jnp.dot(m1, w128_ref[...],
                preferred_element_type=jnp.float32) + row(ROW_MB2, MLP_H2), 0.0)
    # lane-dense (B*S, 128) unmasked store; real logits live in [:, :NUM_CLASSES]
    out_ref[...] = jnp.dot(m2, w64_ref[:, COL_MLP3:COL_MLP3 + LOGIT_PAD],
                           preferred_element_type=jnp.float32) \
        + row(ROW_MB3, LOGIT_PAD)


# ----------------------- per-checkpoint weight packing -----------------------
def prepare_packed(p):
    """Run ONCE per checkpoint (outside the jitted forward): LoRA merge,
    weight-slab packing, logit padding, pos+type embedding pre-add."""
    # eval-mode LoRA merge: w_eff = w + scale * A @ B (bit-identical)
    wq_eff = p['wq'] + LORA_SCALE * (p['lora_a_q'] @ p['lora_b_q'])
    wv_eff = p['wv'] + LORA_SCALE * (p['lora_a_v'] @ p['lora_b_v'])

    w32 = jnp.zeros((H, W32_COLS), jnp.float32)
    w32 = w32.at[:, COL_QKV:COL_QKV + H].set(wq_eff)
    w32 = w32.at[:, COL_QKV + H:COL_QKV + 2 * H].set(p['wk'])
    w32 = w32.at[:, COL_QKV + 2 * H:COL_QKV + 3 * H].set(wv_eff)
    w32 = w32.at[:, COL_WO:COL_WO + H].set(p['wo'])
    w32 = w32.at[:, COL_MLP1:COL_MLP1 + MLP_H1].set(p['mlp_w1'])
    w32 = w32.at[:, COL_FFN1:COL_FFN1 + FFN_I].set(p['ffn_w1'])

    w64 = jnp.zeros((FFN_I, W64_COLS), jnp.float32)      # MLP_H2 == FFN_I == 64
    w64 = w64.at[:, COL_MLP3:COL_MLP3 + NUM_CLASSES].set(p['mlp_w3'])
    w64 = w64.at[:, COL_FFN2:COL_FFN2 + H].set(p['ffn_w2'])

    w128 = p['mlp_w2']                                    # (128, 64)

    vecs = jnp.zeros((VEC_ROWS, 128), jnp.float32)

    def setrow(v, i, x):
        x = x.reshape(-1)
        return v.at[i, :x.shape[0]].set(x)

    b_qkv = jnp.concatenate([p['bq'], p['bk'], p['bv']], axis=-1)
    vecs = setrow(vecs, ROW_EMB_G, p['emb_ln_g'])
    vecs = setrow(vecs, ROW_EMB_B, p['emb_ln_b'])
    vecs = setrow(vecs, ROW_BQKV, b_qkv)
    vecs = setrow(vecs, ROW_BO, p['bo'])
    vecs = setrow(vecs, ROW_LN1_G, p['ln1_g'])
    vecs = setrow(vecs, ROW_LN1_B, p['ln1_b'])
    vecs = setrow(vecs, ROW_BF1, p['ffn_b1'])
    vecs = setrow(vecs, ROW_BF2, p['ffn_b2'])
    vecs = setrow(vecs, ROW_LN2_G, p['ln2_g'])
    vecs = setrow(vecs, ROW_LN2_B, p['ln2_b'])
    vecs = setrow(vecs, ROW_MB1, p['mlp_b1'])
    vecs = setrow(vecs, ROW_MB2, p['mlp_b2'])
    vecs = setrow(vecs, ROW_MB3, p['mlp_b3'])             # pad lanes stay 0

    return {
        'word_emb': p['word_emb'],
        'pos_type': p['pos_emb'] + p['type_emb'][0][None, :],   # (S, H)
        'w32': w32, 'w64': w64, 'w128': w128, 'vecs': vecs,
    }


# ------------------------------- forward -------------------------------------
@jax.jit
def peft_mlp_classifier_forward(input_ids, attention_mask, packed):
    B, S_ = input_ids.shape
    BS = B * S_

    # embedding gather stays in plain JAX (data-dependent); everything else fused
    x_in = (packed['word_emb'][input_ids]
            + packed['pos_type'][None, :, :]).reshape(BS, H)

    # block-diagonal attention bias: same-batch masked keys get -10000
    # (matching BERT's (1-mask)*-10000), cross-batch pairs get -1e9 (exp -> 0).
    key_mask = attention_mask.reshape(BS).astype(jnp.float32)
    batch_idx = jnp.arange(BS, dtype=jnp.int32) // S_
    same = batch_idx[:, None] == batch_idx[None, :]
    attn_bias = jnp.where(same, (1.0 - key_mask)[None, :] * (-10000.0),
                          jnp.float32(CROSS_BATCH_NEG))

    vmem = pl.BlockSpec(memory_space=pltpu.MemorySpace.VMEM)
    logits_pad = pl.pallas_call(
        fused_forward_kernel,
        out_shape=jax.ShapeDtypeStruct((BS, LOGIT_PAD), jnp.float32),
        in_specs=[vmem] * 6,
        out_specs=vmem,
    )(x_in, attn_bias, packed['w32'], packed['w64'], packed['w128'],
      packed['vecs'])

    # CLS rows are 0, S, 2S, ... ; real logits in the first NUM_CLASSES lanes
    return logits_pad[0::S_, :NUM_CLASSES]


# ------------------------------ param init -----------------------------------
def init_params(key):
    def norm(k, shape, scale=0.02):
        return scale * jax.random.normal(k, shape, dtype=jnp.float32)

    ks = iter(jax.random.split(key, 24))
    p = {}
    # embeddings
    p['word_emb'] = norm(next(ks), (VOCAB, H))
    p['pos_emb'] = norm(next(ks), (S, H))
    p['type_emb'] = norm(next(ks), (2, H))
    p['emb_ln_g'] = jnp.ones((1, H), jnp.float32)
    p['emb_ln_b'] = jnp.zeros((1, H), jnp.float32)
    # attention (+ LoRA on q/v); B matrices non-zero so the merge path is
    # actually exercised (as after fine-tuning), unlike PEFT's B=0 init.
    p['wq'] = norm(next(ks), (H, H)); p['bq'] = jnp.zeros((1, H), jnp.float32)
    p['wk'] = norm(next(ks), (H, H)); p['bk'] = jnp.zeros((1, H), jnp.float32)
    p['wv'] = norm(next(ks), (H, H)); p['bv'] = jnp.zeros((1, H), jnp.float32)
    p['lora_a_q'] = norm(next(ks), (H, LORA_R), scale=1.0 / LORA_R)
    p['lora_b_q'] = norm(next(ks), (LORA_R, H), scale=0.02)
    p['lora_a_v'] = norm(next(ks), (H, LORA_R), scale=1.0 / LORA_R)
    p['lora_b_v'] = norm(next(ks), (LORA_R, H), scale=0.02)
    p['wo'] = norm(next(ks), (H, H)); p['bo'] = jnp.zeros((1, H), jnp.float32)
    p['ln1_g'] = jnp.ones((1, H), jnp.float32)
    p['ln1_b'] = jnp.zeros((1, H), jnp.float32)
    # FFN
    p['ffn_w1'] = norm(next(ks), (H, FFN_I))
    p['ffn_b1'] = jnp.zeros((1, FFN_I), jnp.float32)
    p['ffn_w2'] = norm(next(ks), (FFN_I, H))
    p['ffn_b2'] = jnp.zeros((1, H), jnp.float32)
    p['ln2_g'] = jnp.ones((1, H), jnp.float32)
    p['ln2_b'] = jnp.zeros((1, H), jnp.float32)
    # MLP head: Linear(H,128) -> ReLU -> Drop -> Linear(128,64) -> ReLU -> Drop
    #           -> Linear(64, num_classes)
    p['mlp_w1'] = norm(next(ks), (H, MLP_H1), scale=1.0 / math.sqrt(H))
    p['mlp_b1'] = jnp.zeros((1, MLP_H1), jnp.float32)
    p['mlp_w2'] = norm(next(ks), (MLP_H1, MLP_H2), scale=1.0 / math.sqrt(MLP_H1))
    p['mlp_b2'] = jnp.zeros((1, MLP_H2), jnp.float32)
    p['mlp_w3'] = norm(next(ks), (MLP_H2, NUM_CLASSES),
                       scale=1.0 / math.sqrt(MLP_H2))
    p['mlp_b3'] = jnp.zeros((1, NUM_CLASSES), jnp.float32)
    return p


# --------------------------------- main --------------------------------------
if __name__ == "__main__":
    B = 2
    root = jax.random.PRNGKey(0)
    k_params, k_ids = jax.random.split(root, 2)
    params = init_params(k_params)
    packed = prepare_packed(params)          # once per checkpoint, outside jit

    input_ids = jax.random.randint(k_ids, (B, S), 0, VOCAB, dtype=jnp.int32)
    attention_mask = jnp.ones((B, S), dtype=jnp.int32).at[1, 6:].set(0)

    logits = peft_mlp_classifier_forward(input_ids, attention_mask, packed)
    jax.block_until_ready(logits)
    assert logits.shape == (B, NUM_CLASSES), logits.shape
    assert logits.dtype == jnp.float32
    assert bool(jnp.all(jnp.isfinite(logits)))
    print("KERNEL_OK")
</pallas_src>

<mosaic_0001>
module attributes {stable_mosaic.version = 11 : i64} {
  func.func @fused_forward_kernel(%arg0: memref<16x32xf32, #tpu.memory_space<vmem>>, %arg1: memref<16x16xf32, #tpu.memory_space<vmem>>, %arg2: memref<32x320xf32, #tpu.memory_space<vmem>>, %arg3: memref<64x160xf32, #tpu.memory_space<vmem>>, %arg4: memref<128x64xf32, #tpu.memory_space<vmem>>, %arg5: memref<16x128xf32, #tpu.memory_space<vmem>>, %arg6: memref<16x128xf32, #tpu.memory_space<vmem>>) attributes {dimension_semantics = [], scalar_prefetch = 0 : i64, scratch_operands = 0 : i64, tpu.core_type = #tpu.core_type<tc>} {
    %c0 = arith.constant 0 : index
    %c0_0 = arith.constant 0 : index
    %0 = vector.load %arg5[%c0, %c0_0] : memref<16x128xf32, #tpu.memory_space<vmem>>, vector<16x128xf32>
    %c0_1 = arith.constant 0 : index
    %c0_2 = arith.constant 0 : index
    %1 = vector.load %arg0[%c0_1, %c0_2] : memref<16x32xf32, #tpu.memory_space<vmem>>, vector<16x32xf32>
    %2 = vector.extract_strided_slice %0 {offsets = [0, 0], sizes = [1, 32], strides = [1, 1]} : vector<16x128xf32> to vector<1x32xf32>
    %3 = vector.extract_strided_slice %0 {offsets = [1, 0], sizes = [1, 32], strides = [1, 1]} : vector<16x128xf32> to vector<1x32xf32>
    %cst = arith.constant dense<0.000000e+00> : vector<16xf32>
    %4 = vector.multi_reduction <add>, %1, %cst [1] : vector<16x32xf32> to vector<16xf32>
    %5 = vector.shape_cast %4 : vector<16xf32> to vector<16x1xf32>
    %cst_3 = arith.constant 3.200000e+01 : f32
    %6 = vector.broadcast %cst_3 : f32 to vector<16x1xf32>
    %7 = arith.divf %5, %6 : vector<16x1xf32>
    %8 = vector.broadcast %7 : vector<16x1xf32> to vector<16x32xf32>
    %9 = arith.subf %1, %8 : vector<16x32xf32>
    %10 = arith.mulf %9, %9 : vector<16x32xf32>
    %cst_4 = arith.constant dense<0.000000e+00> : vector<16xf32>
    %11 = vector.multi_reduction <add>, %10, %cst_4 [1] : vector<16x32xf32> to vector<16xf32>
    %12 = vector.shape_cast %11 : vector<16xf32> to vector<16x1xf32>
    %cst_5 = arith.constant 3.200000e+01 : f32
    %13 = vector.broadcast %cst_5 : f32 to vector<16x1xf32>
    %14 = arith.divf %12, %13 : vector<16x1xf32>
    %15 = vector.broadcast %7 : vector<16x1xf32> to vector<16x32xf32>
    %16 = arith.subf %1, %15 : vector<16x32xf32>
    %cst_6 = arith.constant 9.99999996E-13 : f32
    %17 = vector.broadcast %cst_6 : f32 to vector<16x1xf32>
    %18 = arith.addf %14, %17 : vector<16x1xf32>
    %19 = math.rsqrt %18 : vector<16x1xf32>
    %20 = vector.broadcast %19 : vector<16x1xf32> to vector<16x32xf32>
    %21 = arith.mulf %16, %20 : vector<16x32xf32>
    %22 = vector.broadcast %2 : vector<1x32xf32> to vector<16x32xf32>
    %23 = arith.mulf %21, %22 : vector<16x32xf32>
    %24 = vector.broadcast %3 : vector<1x32xf32> to vector<16x32xf32>
    %25 = arith.addf %23, %24 : vector<16x32xf32>
    %c0_7 = arith.constant 0 : index
    %c0_8 = arith.constant 0 : index
    %26 = vector.load %arg2[%c0_7, %c0_8] : memref<32x320xf32, #tpu.memory_space<vmem>>, vector<32x96xf32>
    %cst_9 = arith.constant dense<0.000000e+00> : vector<16x96xf32>
    %27 = tpu.matmul %25, %26, %cst_9 {dimension_numbers = #tpu.dot_dimension_numbers<[1], [0], [0], [1], [0, 0, 1, 1], [], []>} : vector<16x32xf32>, vector<32x96xf32>, vector<16x96xf32> -> vector<16x96xf32>
    %28 = vector.extract_strided_slice %0 {offsets = [2, 0], sizes = [1, 96], strides = [1, 1]} : vector<16x128xf32> to vector<1x96xf32>
    %29 = vector.broadcast %28 : vector<1x96xf32> to vector<16x96xf32>
    %30 = arith.addf %27, %29 : vector<16x96xf32>
    %31 = vector.extract_strided_slice %30 {offsets = [0, 0], sizes = [16, 32], strides = [1, 1]} : vector<16x96xf32> to vector<16x32xf32>
    %32 = vector.extract_strided_slice %30 {offsets = [0, 32], sizes = [16, 32], strides = [1, 1]} : vector<16x96xf32> to vector<16x32xf32>
    %33 = vector.extract_strided_slice %30 {offsets = [0, 64], sizes = [16, 32], strides = [1, 1]} : vector<16x96xf32> to vector<16x32xf32>
    %cst_10 = arith.constant dense<0.000000e+00> : vector<16x16xf32>
    %34 = tpu.matmul %31, %32, %cst_10 {dimension_numbers = #tpu.dot_dimension_numbers<[1], [1], [0], [0], [0, 0, 1, 0], [], []>} : vector<16x32xf32>, vector<16x32xf32>, vector<16x16xf32> -> vector<16x16xf32>
    %cst_11 = arith.constant 0.176776692 : f32
    %35 = vector.broadcast %cst_11 : f32 to vector<16x16xf32>
    %36 = arith.mulf %34, %35 : vector<16x16xf32>
    %c0_12 = arith.constant 0 : index
    %c0_13 = arith.constant 0 : index
    %37 = vector.load %arg1[%c0_12, %c0_13] : memref<16x16xf32, #tpu.memory_space<vmem>>, vector<16x16xf32>
    %38 = arith.addf %36, %37 : vector<16x16xf32>
    %cst_14 = arith.constant dense<0xFF800000> : vector<16xf32>
    %39 = vector.multi_reduction <maximumf>, %38, %cst_14 [1] : vector<16x16xf32> to vector<16xf32>
    %40 = vector.shape_cast %39 : vector<16xf32> to vector<16x1xf32>
    %41 = vector.broadcast %40 : vector<16x1xf32> to vector<16x16xf32>
    %42 = arith.subf %38, %41 : vector<16x16xf32>
    %43 = math.exp %42 : vector<16x16xf32>
    %cst_15 = arith.constant dense<0.000000e+00> : vector<16xf32>
    %44 = vector.multi_reduction <add>, %43, %cst_15 [1] : vector<16x16xf32> to vector<16xf32>
    %45 = vector.shape_cast %44 : vector<16xf32> to vector<16x1xf32>
    %46 = tpu.reciprocal %45 {approx = true} : vector<16x1xf32> -> vector<16x1xf32>
    %47 = vector.broadcast %46 : vector<16x1xf32> to vector<16x16xf32>
    %48 = arith.mulf %43, %47 : vector<16x16xf32>
    %cst_16 = arith.constant dense<0.000000e+00> : vector<16x32xf32>
    %49 = tpu.matmul %48, %33, %cst_16 {dimension_numbers = #tpu.dot_dimension_numbers<[1], [0], [0], [1], [0, 0, 1, 1], [], []>} : vector<16x16xf32>, vector<16x32xf32>, vector<16x32xf32> -> vector<16x32xf32>
    %c0_17 = arith.constant 0 : index
    %c96 = arith.constant 96 : index
    %50 = vector.load %arg2[%c0_17, %c96] : memref<32x320xf32, #tpu.memory_space<vmem>>, vector<32x32xf32>
    %cst_18 = arith.constant dense<0.000000e+00> : vector<16x32xf32>
    %51 = tpu.matmul %49, %50, %cst_18 {dimension_numbers = #tpu.dot_dimension_numbers<[1], [0], [0], [1], [0, 0, 1, 1], [], []>} : vector<16x32xf32>, vector<32x32xf32>, vector<16x32xf32> -> vector<16x32xf32>
    %52 = vector.extract_strided_slice %0 {offsets = [3, 0], sizes = [1, 32], strides = [1, 1]} : vector<16x128xf32> to vector<1x32xf32>
    %53 = vector.broadcast %52 : vector<1x32xf32> to vector<16x32xf32>
    %54 = arith.addf %51, %53 : vector<16x32xf32>
    %55 = arith.addf %25, %54 : vector<16x32xf32>
    %56 = vector.extract_strided_slice %0 {offsets = [4, 0], sizes = [1, 32], strides = [1, 1]} : vector<16x128xf32> to vector<1x32xf32>
    %57 = vector.extract_strided_slice %0 {offsets = [5, 0], sizes = [1, 32], strides = [1, 1]} : vector<16x128xf32> to vector<1x32xf32>
    %cst_19 = arith.constant dense<0.000000e+00> : vector<16xf32>
    %58 = vector.multi_reduction <add>, %55, %cst_19 [1] : vector<16x32xf32> to vector<16xf32>
    %59 = vector.shape_cast %58 : vector<16xf32> to vector<16x1xf32>
    %cst_20 = arith.constant 3.200000e+01 : f32
    %60 = vector.broadcast %cst_20 : f32 to vector<16x1xf32>
    %61 = arith.divf %59, %60 : vector<16x1xf32>
    %62 = vector.broadcast %61 : vector<16x1xf32> to vector<16x32xf32>
    %63 = arith.subf %55, %62 : vector<16x32xf32>
    %64 = arith.mulf %63, %63 : vector<16x32xf32>
    %cst_21 = arith.constant dense<0.000000e+00> : vector<16xf32>
    %65 = vector.multi_reduction <add>, %64, %cst_21 [1] : vector<16x32xf32> to vector<16xf32>
    %66 = vector.shape_cast %65 : vector<16xf32> to vector<16x1xf32>
    %cst_22 = arith.constant 3.200000e+01 : f32
    %67 = vector.broadcast %cst_22 : f32 to vector<16x1xf32>
    %68 = arith.divf %66, %67 : vector<16x1xf32>
    %69 = vector.broadcast %61 : vector<16x1xf32> to vector<16x32xf32>
    %70 = arith.subf %55, %69 : vector<16x32xf32>
    %cst_23 = arith.constant 9.99999996E-13 : f32
    %71 = vector.broadcast %cst_23 : f32 to vector<16x1xf32>
    %72 = arith.addf %68, %71 : vector<16x1xf32>
    %73 = math.rsqrt %72 : vector<16x1xf32>
    %74 = vector.broadcast %73 : vector<16x1xf32> to vector<16x32xf32>
    %75 = arith.mulf %70, %74 : vector<16x32xf32>
    %76 = vector.broadcast %56 : vector<1x32xf32> to vector<16x32xf32>
    %77 = arith.mulf %75, %76 : vector<16x32xf32>
    %78 = vector.broadcast %57 : vector<1x32xf32> to vector<16x32xf32>
    %79 = arith.addf %77, %78 : vector<16x32xf32>
    %c0_24 = arith.constant 0 : index
    %c256 = arith.constant 256 : index
    %80 = vector.load %arg2[%c0_24, %c256] : memref<32x320xf32, #tpu.memory_space<vmem>>, vector<32x64xf32>
    %cst_25 = arith.constant dense<0.000000e+00> : vector<16x64xf32>
    %81 = tpu.matmul %79, %80, %cst_25 {dimension_numbers = #tpu.dot_dimension_numbers<[1], [0], [0], [1], [0, 0, 1, 1], [], []>} : vector<16x32xf32>, vector<32x64xf32>, vector<16x64xf32> -> vector<16x64xf32>
    %82 = vector.extract_strided_slice %0 {offsets = [6, 0], sizes = [1, 64], strides = [1, 1]} : vector<16x128xf32> to vector<1x64xf32>
    %83 = vector.broadcast %82 : vector<1x64xf32> to vector<16x64xf32>
    %84 = arith.addf %81, %83 : vector<16x64xf32>
    %cst_26 = arith.constant 5.000000e-01 : f32
    %85 = vector.broadcast %cst_26 : f32 to vector<16x64xf32>
    %86 = arith.mulf %85, %84 : vector<16x64xf32>
    %cst_27 = arith.constant 4.471500e-02 : f32
    %87 = vector.broadcast %cst_27 : f32 to vector<16x64xf32>
    %88 = arith.mulf %87, %84 : vector<16x64xf32>
    %89 = arith.mulf %88, %84 : vector<16x64xf32>
    %90 = arith.mulf %89, %84 : vector<16x64xf32>
    %91 = arith.addf %84, %90 : vector<16x64xf32>
    %cst_28 = arith.constant 0.797884583 : f32
    %92 = vector.broadcast %cst_28 : f32 to vector<16x64xf32>
    %93 = arith.mulf %92, %91 : vector<16x64xf32>
    %94 = math.tanh %93 : vector<16x64xf32>
    %cst_29 = arith.constant 1.000000e+00 : f32
    %95 = vector.broadcast %cst_29 : f32 to vector<16x64xf32>
    %96 = arith.addf %95, %94 : vector<16x64xf32>
    %97 = arith.mulf %86, %96 : vector<16x64xf32>
    %c0_30 = arith.constant 0 : index
    %c128 = arith.constant 128 : index
    %98 = vector.load %arg3[%c0_30, %c128] : memref<64x160xf32, #tpu.memory_space<vmem>>, vector<64x32xf32>
    %cst_31 = arith.constant dense<0.000000e+00> : vector<16x32xf32>
    %99 = tpu.matmul %97, %98, %cst_31 {dimension_numbers = #tpu.dot_dimension_numbers<[1], [0], [0], [1], [0, 0, 1, 1], [], []>} : vector<16x64xf32>, vector<64x32xf32>, vector<16x32xf32> -> vector<16x32xf32>
    %100 = vector.extract_strided_slice %0 {offsets = [7, 0], sizes = [1, 32], strides = [1, 1]} : vector<16x128xf32> to vector<1x32xf32>
    %101 = vector.broadcast %100 : vector<1x32xf32> to vector<16x32xf32>
    %102 = arith.addf %99, %101 : vector<16x32xf32>
    %103 = arith.addf %79, %102 : vector<16x32xf32>
    %104 = vector.extract_strided_slice %0 {offsets = [8, 0], sizes = [1, 32], strides = [1, 1]} : vector<16x128xf32> to vector<1x32xf32>
    %105 = vector.extract_strided_slice %0 {offsets = [9, 0], sizes = [1, 32], strides = [1, 1]} : vector<16x128xf32> to vector<1x32xf32>
    %cst_32 = arith.constant dense<0.000000e+00> : vector<16xf32>
    %106 = vector.multi_reduction <add>, %103, %cst_32 [1] : vector<16x32xf32> to vector<16xf32>
    %107 = vector.shape_cast %106 : vector<16xf32> to vector<16x1xf32>
    %cst_33 = arith.constant 3.200000e+01 : f32
    %108 = vector.broadcast %cst_33 : f32 to vector<16x1xf32>
    %109 = arith.divf %107, %108 : vector<16x1xf32>
    %110 = vector.broadcast %109 : vector<16x1xf32> to vector<16x32xf32>
    %111 = arith.subf %103, %110 : vector<16x32xf32>
    %112 = arith.mulf %111, %111 : vector<16x32xf32>
    %cst_34 = arith.constant dense<0.000000e+00> : vector<16xf32>
    %113 = vector.multi_reduction <add>, %112, %cst_34 [1] : vector<16x32xf32> to vector<16xf32>
    %114 = vector.shape_cast %113 : vector<16xf32> to vector<16x1xf32>
    %cst_35 = arith.constant 3.200000e+01 : f32
    %115 = vector.broadcast %cst_35 : f32 to vector<16x1xf32>
    %116 = arith.divf %114, %115 : vector<16x1xf32>
    %117 = vector.broadcast %109 : vector<16x1xf32> to vector<16x32xf32>
    %118 = arith.subf %103, %117 : vector<16x32xf32>
    %cst_36 = arith.constant 9.99999996E-13 : f32
    %119 = vector.broadcast %cst_36 : f32 to vector<16x1xf32>
    %120 = arith.addf %116, %119 : vector<16x1xf32>
    %121 = math.rsqrt %120 : vector<16x1xf32>
    %122 = vector.broadcast %121 : vector<16x1xf32> to vector<16x32xf32>
    %123 = arith.mulf %118, %122 : vector<16x32xf32>
    %124 = vector.broadcast %104 : vector<1x32xf32> to vector<16x32xf32>
    %125 = arith.mulf %123, %124 : vector<16x32xf32>
    %126 = vector.broadcast %105 : vector<1x32xf32> to vector<16x32xf32>
    %127 = arith.addf %125, %126 : vector<16x32xf32>
    %c0_37 = arith.constant 0 : index
    %c128_38 = arith.constant 128 : index
    %128 = vector.load %arg2[%c0_37, %c128_38] : memref<32x320xf32, #tpu.memory_space<vmem>>, vector<32x128xf32>
    %cst_39 = arith.constant dense<0.000000e+00> : vector<16x128xf32>
    %129 = tpu.matmul %127, %128, %cst_39 {dimension_numbers = #tpu.dot_dimension_numbers<[1], [0], [0], [1], [0, 0, 1, 1], [], []>} : vector<16x32xf32>, vector<32x128xf32>, vector<16x128xf32> -> vector<16x128xf32>
    %130 = vector.extract_strided_slice %0 {offsets = [10, 0], sizes = [1, 128], strides = [1, 1]} : vector<16x128xf32> to vector<1x128xf32>
    %131 = vector.broadcast %130 : vector<1x128xf32> to vector<16x128xf32>
    %132 = arith.addf %129, %131 : vector<16x128xf32>
    %cst_40 = arith.constant 0.000000e+00 : f32
    %133 = vector.broadcast %cst_40 : f32 to vector<16x128xf32>
    %134 = arith.maximumf %132, %133 : vector<16x128xf32>
    %c0_41 = arith.constant 0 : index
    %c0_42 = arith.constant 0 : index
    %135 = vector.load %arg4[%c0_41, %c0_42] : memref<128x64xf32, #tpu.memory_space<vmem>>, vector<128x64xf32>
    %cst_43 = arith.constant dense<0.000000e+00> : vector<16x64xf32>
    %136 = tpu.matmul %134, %135, %cst_43 {dimension_numbers = #tpu.dot_dimension_numbers<[1], [0], [0], [1], [0, 0, 1, 1], [], []>} : vector<16x128xf32>, vector<128x64xf32>, vector<16x64xf32> -> vector<16x64xf32>
    %137 = vector.extract_strided_slice %0 {offsets = [11, 0], sizes = [1, 64], strides = [1, 1]} : vector<16x128xf32> to vector<1x64xf32>
    %138 = vector.broadcast %137 : vector<1x64xf32> to vector<16x64xf32>
    %139 = arith.addf %136, %138 : vector<16x64xf32>
    %cst_44 = arith.constant 0.000000e+00 : f32
    %140 = vector.broadcast %cst_44 : f32 to vector<16x64xf32>
    %141 = arith.maximumf %139, %140 : vector<16x64xf32>
    %c0_45 = arith.constant 0 : index
    %c0_46 = arith.constant 0 : index
    %142 = vector.load %arg3[%c0_45, %c0_46] : memref<64x160xf32, #tpu.memory_space<vmem>>, vector<64x128xf32>
    %cst_47 = arith.constant dense<0.000000e+00> : vector<16x128xf32>
    %143 = tpu.matmul %141, %142, %cst_47 {dimension_numbers = #tpu.dot_dimension_numbers<[1], [0], [0], [1], [0, 0, 1, 1], [], []>} : vector<16x64xf32>, vector<64x128xf32>, vector<16x128xf32> -> vector<16x128xf32>
    %144 = vector.extract_strided_slice %0 {offsets = [12, 0], sizes = [1, 128], strides = [1, 1]} : vector<16x128xf32> to vector<1x128xf32>
    %145 = vector.broadcast %144 : vector<1x128xf32> to vector<16x128xf32>
    %146 = arith.addf %143, %145 : vector<16x128xf32>
    %c0_48 = arith.constant 0 : index
    %c0_49 = arith.constant 0 : index
    %147 = vector.load %arg6[%c0_48, %c0_49] : memref<16x128xf32, #tpu.memory_space<vmem>>, vector<16x128xf32>
    tpu.vector_store %arg6[%c0_48, %c0_49], %146 {strides = array<i32>} : memref<16x128xf32, #tpu.memory_space<vmem>>, vector<16x128xf32>,
    return
  }
}

</mosaic_0001>

<llo_original>
// kernel: peft_mlp_classifier_forward.1
$region0: #{peft_mlp_classifier_forward.1}
  #allocation0 [shape = 'u32[]', space=smem, size = 0x4, offset = 0x4, fixed_abs, tag = 'smem constant byte address 0x4 - core index']
  #allocation1 [shape = 'u32[144,128]{1,0:T(1,128)}', space=vmem, size = 0x12000, scoped, tag = 'internal scratch']
  %s0 = inlined_call_operand.vmem [shape: f32[16,32], index: 0, kind: input, shape index: {}]
  %s1 = inlined_call_operand.vmem [shape: f32[16,16], index: 1, kind: input, shape index: {}]
  %s2 = inlined_call_operand.vmem [shape: f32[32,320], index: 2, kind: input, shape index: {}]
  %s3 = inlined_call_operand.vmem [shape: f32[64,160], index: 3, kind: input, shape index: {}]
  %s4 = inlined_call_operand.vmem [shape: f32[128,64], index: 4, kind: input, shape index: {}]
  %s5 = inlined_call_operand.vmem [shape: f32[16,128], index: 5, kind: input, shape index: {}]
  %s6 = inlined_call_operand.vmem [shape: f32[16,128], index: 6, kind: output, shape index: {}]
  %s7 = sld [smem:[#allocation0]]
  $region34: #{peft_mlp_classifier_forward.1} parent=0
    _
  %s9 = ssub.s32 1, %s7
  %s10 = scalar_select 0, %s9, %s7
  // Predicated region
  $region2: #{peft_mlp_classifier_forward.1} parent=0 // pred_check
    _
  $region3: #{peft_mlp_classifier_forward.1} parent=0 // pred_check_branch
    %12 = sbr.rel (0) target = $region5
  $region4: #{peft_mlp_classifier_forward.1} parent=0 // pred_region
    _
  $region5: #{peft_mlp_classifier_forward.1} parent=0 // pred_fallthru
    _
  // Predicated region
  $region6: #{peft_mlp_classifier_forward.1} parent=0 // pred_check
    _
  $region7: #{peft_mlp_classifier_forward.1} parent=0 // pred_check_branch
    %14 = sbr.rel (0) target = $region9
  $region8: #{peft_mlp_classifier_forward.1} parent=0 // pred_region
    _
  $region9: #{peft_mlp_classifier_forward.1} parent=0 // pred_fallthru
    _
  // Predicated region
  $region10: #{peft_mlp_classifier_forward.1} parent=0 // pred_check
    _
  $region11: #{peft_mlp_classifier_forward.1} parent=0 // pred_check_branch
    %16 = sbr.rel (0) target = $region13
  $region12: #{peft_mlp_classifier_forward.1} parent=0 // pred_region
    _
  $region13: #{peft_mlp_classifier_forward.1} parent=0 // pred_fallthru
    _
  // Predicated region
  $region14: #{peft_mlp_classifier_forward.1} parent=0 // pred_check
    _
  $region15: #{peft_mlp_classifier_forward.1} parent=0 // pred_check_branch
    %18 = sbr.rel (0) target = $region17
  $region16: #{peft_mlp_classifier_forward.1} parent=0 // pred_region
    _
  $region17: #{peft_mlp_classifier_forward.1} parent=0 // pred_fallthru
    _
  // Predicated region
  $region18: #{peft_mlp_classifier_forward.1} parent=0 // pred_check
    _
  $region19: #{peft_mlp_classifier_forward.1} parent=0 // pred_check_branch
    %20 = sbr.rel (0) target = $region21
  $region20: #{peft_mlp_classifier_forward.1} parent=0 // pred_region
    _
  $region21: #{peft_mlp_classifier_forward.1} parent=0 // pred_fallthru
    _
  // Predicated region
  $region22: #{peft_mlp_classifier_forward.1} parent=0 // pred_check
    _
  $region23: #{peft_mlp_classifier_forward.1} parent=0 // pred_check_branch
    %22 = sbr.rel (0) target = $region25
  $region24: #{peft_mlp_classifier_forward.1} parent=0 // pred_region
    _
  $region25: #{peft_mlp_classifier_forward.1} parent=0 // pred_fallthru
    _
  %v23 = vld [vmem:[%s5] sm:$0xff]
  %v24 = vld [vmem:[%s5 + $0x8] sm:$0xff]
  %v25 = vld [vmem:[%s0] sm:$0xff]
  %v26 = vld [vmem:[%s0 + $0x8] sm:$0xff]
  %vm27 = vcmask 261120
  %v28 = vsel %vm27, %v25, 0.0
  %29 = vadd.xlane.f32.xlu0 %v28
  %v30 = vpop.xlane.xlu0 %29
  %v31 = vsel %vm27, %v26, 0.0
  %32 = vadd.xlane.f32.xlu0 %v31
  %v33 = vpop.xlane.xlu0 %32
  %v34 = vrcp.pop 32.0
  %v35 = vmul.f32 %v30, %v34
  %v36 = vmul.f32 %v33, %v34
  %v37 = vsub.f32 %v25, %v35
  %v38 = vsub.f32 %v26, %v36
  %v39 = vmul.f32 %v37, %v37
  %v40 = vmul.f32 %v38, %v38
  %v41 = vsel %vm27, %v39, 0.0
  %42 = vadd.xlane.f32.xlu0 %v41
  %v43 = vpop.xlane.xlu0 %42
  %v44 = vsel %vm27, %v40, 0.0
  %45 = vadd.xlane.f32.xlu0 %v44
  %v46 = vpop.xlane.xlu0 %45
  %v47 = vmul.f32 %v43, %v34
  %v48 = vmul.f32 %v46, %v34
  %v49 = vadd.f32 %v47, 1e-12
  %v50 = vadd.f32 %v48, 1e-12
  %v51 = vrsqrt.pop %v49
  %v52 = vrsqrt.pop %v50
  %v53 = vmul.f32 %v37, %v51
  %v54 = vmul.f32 %v38, %v52
  %v55 = vlaneseq
  %v56 = vshrl.u32 %v55, 7
  %v57 = vsub.s32 0, %v56
  %v58 = vrot.slane %v23, %v57
  %v59 = vmul.f32 %v53, %v58
  %v60 = vmul.f32 %v54, %v58
  %v61 = vlaneseq
  %v62 = vshrl.u32 %v61, 7
  %v63 = vsub.s32 1, %v62
  %v64 = vrot.slane %v23, %v63
  %v65 = vadd.f32 %v59, %v64
  %v66 = vadd.f32 %v60, %v64
  %v67 = vld [vmem:[%s2] sm:$0xff]
  %v68 = vld [vmem:[%s2 + $0x18] sm:$0xff]
  %v69 = vld [vmem:[%s2 + $0x30] sm:$0xff]
  %v70 = vld [vmem:[%s2 + $0x48] sm:$0xff]
  %v71 = vlaneseq
  %v72 = vshrl.u32 %v71, 7
  %v73 = vsub.s32 2, %v72
  %v74 = vrot.slane %v23, %v73
  %v76 = vsel %vm27, %v65, 0
  %v79 = vsel %vm27, %v66, 0
  %81 = vmatprep.subr.mxu0 0.0
  %82 = vmatpush1.msra.mxu0 0.0
  %83 = vmatprep.subr.mxu0 0.0
  %84 = vmatpush1.msra.mxu0 0.0
  %85 = vmatprep.subr.mxu0 0.0
  %86 = vmatpush1.msra.mxu0 0.0
  %87 = vmatprep.subr.mxu0 0.0
  %88 = vmatpush1.msra.mxu0 0.0
  %89 = vmatprep.subr.mxu0 0.0
  %90 = vmatpush1.msra.mxu0 0.0
  %91 = vmatprep.subr.mxu0 0.0
  %92 = vmatpush1.msra.mxu0 0.0
  %93 = vmatprep.subr.mxu0 0.0
  %94 = vmatpush1.msra.mxu0 0.0
  %95 = vmatprep.subr.mxu0 0.0
  %96 = vmatpush1.msra.mxu0 0.0
  %97 = vmatprep.subr.mxu0 0.0
  %98 = vmatpush1.msra.mxu0 0.0
  %99 = vmatprep.subr.mxu0 0.0
  %100 = vmatpush1.msra.mxu0 0.0
  %101 = vmatprep.subr.mxu0 0.0
  %102 = vmatpush1.msra.mxu0 0.0
  %103 = vmatprep.subr.mxu0 0.0
  %104 = vmatpush1.msra.mxu0 0.0
  %105 = vmatprep.subr.mxu0 0.0
  %106 = vmatpush1.msra.mxu0 %v70
  %107 = vmatprep.subr.mxu0 0.0
  %108 = vmatpush1.msra.mxu0 %v69
  %109 = vmatprep.subr.mxu0 0.0
  %110 = vmatpush1.msra.mxu0 %v68
  %111 = vmatprep.subr.mxu0 0.0
  %112 = vmatpush1.msra.mxu0 %v67
  %113 = vmatprep.subr.mxu0 0.0
  %114 = vmatpush2.msra.mxu0 0.0
  %115 = vmatprep.subr.mxu0 0.0
  %116 = vmatpush2.msra.mxu0 0.0
  %117 = vmatprep.subr.mxu0 0.0
  %118 = vmatpush2.msra.mxu0 0.0
  %119 = vmatprep.subr.mxu0 0.0
  %120 = vmatpush2.msra.mxu0 0.0
  %121 = vmatprep.subr.mxu0 0.0
  %122 = vmatpush2.msra.mxu0 0.0
  %123 = vmatprep.subr.mxu0 0.0
  %124 = vmatpush2.msra.mxu0 0.0
  %125 = vmatprep.subr.mxu0 0.0
  %126 = vmatpush2.msra.mxu0 0.0
  %127 = vmatprep.subr.mxu0 0.0
  %128 = vmatpush2.msra.mxu0 0.0
  %129 = vmatprep.subr.mxu0 0.0
  %130 = vmatpush2.msra.mxu0 0.0
  %131 = vmatprep.subr.mxu0 0.0
  %132 = vmatpush2.msra.mxu0 0.0
  %133 = vmatprep.subr.mxu0 0.0
  %134 = vmatpush2.msra.mxu0 0.0
  %135 = vmatprep.subr.mxu0 0.0
  %136 = vmatpush2.msra.mxu0 0.0
  %137 = vmatprep.subr.mxu0 0.0
  %138 = vmatpush2.msra.mxu0 0.0
  %139 = vmatprep.subr.mxu0 0.0
  %140 = vmatpush2.msra.mxu0 0.0
  %141 = vmatprep.subr.mxu0 0.0
  %142 = vmatpush2.msra.mxu0 0.0
  %143 = vmatprep.subr.mxu0 0.0
  %144 = vmatpush2.msra.mxu0 0.0
  %145 = vmatprep.mubr.f32.mxu0 0.0
  %146 = vmatmul.mubr.f32.gmra.mxu0 %v76
  %v147 = vpop.f32.mrf.mxu0
  %v148 = vadd.f32 %v74, %v147
  %v149 = vpop.f32.mrf.mxu0
  %150 = vmatprep.mubr.f32.mxu0 0.0
  %151 = vmatmul.mubr.f32.gmra.mxu0 %v79
  %v152 = vpop.f32.mrf.mxu0
  %v153 = vadd.f32 %v74, %v152
  %v154 = vpop.f32.mrf.mxu0
  %155 = vdwg.mxu0
  %158 = vrot.lane.b32.xlu0 %v148, 96
  %v159 = vpop.permute.xlu0 %158
  %160 = vrot.lane.b32.xlu0 %v153, 96
  %v161 = vpop.permute.xlu0 %160
  %v162 = vsel %vm27, %v148, 0
  %v164 = vsel %vm27, %v153, 0
  %v166 = vsel %vm27, %v159, 0
  %v168 = vsel %vm27, %v161, 0
  %170 = vmatprep.subr.mxu0 0.0
  %171 = vmatpush1.xpose.msra.mxu0 0.0
  %172 = vmatprep.subr.mxu0 0.0
  %173 = vmatpush1.xpose.msra.mxu0 0.0
  %174 = vmatprep.subr.mxu0 0.0
  %175 = vmatpush1.xpose.msra.mxu0 0.0
  %176 = vmatprep.subr.mxu0 0.0
  %177 = vmatpush1.xpose.msra.mxu0 0.0
  %178 = vmatprep.subr.mxu0 0.0
  %179 = vmatpush1.xpose.msra.mxu0 0.0
  %180 = vmatprep.subr.mxu0 0.0
  %181 = vmatpush1.xpose.msra.mxu0 0.0
  %182 = vmatprep.subr.mxu0 0.0
  %183 = vmatpush1.xpose.msra.mxu0 0.0
  %184 = vmatprep.subr.mxu0 0.0
  %185 = vmatpush1.xpose.msra.mxu0 0.0
  %186 = vmatprep.subr.mxu0 0.0
  %187 = vmatpush1.xpose.msra.mxu0 0.0
  %188 = vmatprep.subr.mxu0 0.0
  %189 = vmatpush1.xpose.msra.mxu0 0.0
  %190 = vmatprep.subr.mxu0 0.0
  %191 = vmatpush1.xpose.msra.mxu0 0.0
  %192 = vmatprep.subr.mxu0 0.0
  %193 = vmatpush1.xpose.msra.mxu0 0.0
  %194 = vmatprep.subr.mxu0 0.0
  %195 = vmatpush1.xpose.msra.mxu0 0.0
  %196 = vmatprep.subr.mxu0 0.0
  %197 = vmatpush1.xpose.msra.mxu0 0.0
  %198 = vmatprep.subr.mxu0 0.0
  %199 = vmatpush1.xpose.msra.mxu0 %v168
  %200 = vmatprep.subr.mxu0 0.0
  %201 = vmatpush1.xpose.msra.mxu0 %v166
  %202 = vmatprep.subr.mxu0 0.0
  %203 = vmatpush2.xpose.msra.mxu0 0.0
  %204 = vmatprep.subr.mxu0 0.0
  %205 = vmatpush2.xpose.msra.mxu0 0.0
  %206 = vmatprep.subr.mxu0 0.0
  %207 = vmatpush2.xpose.msra.mxu0 0.0
  %208 = vmatprep.subr.mxu0 0.0
  %209 = vmatpush2.xpose.msra.mxu0 0.0
  %210 = vmatprep.subr.mxu0 0.0
  %211 = vmatpush2.xpose.msra.mxu0 0.0
  %212 = vmatprep.subr.mxu0 0.0
  %213 = vmatpush2.xpose.msra.mxu0 0.0
  %214 = vmatprep.subr.mxu0 0.0
  %215 = vmatpush2.xpose.msra.mxu0 0.0
  %216 = vmatprep.subr.mxu0 0.0
  %217 = vmatpush2.xpose.msra.mxu0 0.0
  %218 = vmatprep.subr.mxu0 0.0
  %219 = vmatpush2.xpose.msra.mxu0 0.0
  %220 = vmatprep.subr.mxu0 0.0
  %221 = vmatpush2.xpose.msra.mxu0 0.0
  %222 = vmatprep.subr.mxu0 0.0
  %223 = vmatpush2.xpose.msra.mxu0 0.0
  %224 = vmatprep.subr.mxu0 0.0
  %225 = vmatpush2.xpose.msra.mxu0 0.0
  %226 = vmatprep.subr.mxu0 0.0
  %227 = vmatpush2.xpose.msra.mxu0 0.0
  %228 = vmatprep.subr.mxu0 0.0
  %229 = vmatpush2.xpose.msra.mxu0 0.0
  %230 = vmatprep.subr.mxu0 0.0
  %231 = vmatpush2.xpose.msra.mxu0 0.0
  %232 = vmatprep.subr.mxu0 0.0
  %233 = vmatpush2.xpose.msra.mxu0 0.0
  %234 = vmatprep.mubr.f32.mxu0 0.0
  %235 = vmatmul.mubr.f32.gmra.mxu0 %v162
  %v236 = vpop.f32.mrf.mxu0
  %v237 = vadd.f32 0.0, %v236
  %v238 = vpop.f32.mrf.mxu0
  %239 = vmatprep.mubr.f32.mxu0 0.0
  %240 = vmatmul.mubr.f32.gmra.mxu0 %v164
  %v241 = vpop.f32.mrf.mxu0
  %v242 = vadd.f32 0.0, %v241
  %v243 = vpop.f32.mrf.mxu0
  %244 = vdwg.mxu0
  %v245 = vmul.f32 %v237, 0.17677669
  %v246 = vmul.f32 %v242, 0.17677669
  %v247 = vld [vmem:[%s1] sm:$0xff]
  %v248 = vld [vmem:[%s1 + $0x8] sm:$0xff]
  %v249 = vadd.f32 %v245, %v247
  %v250 = vadd.f32 %v246, %v248
  %vm251 = vcmask 130048
  %v252 = vsel %vm251, %v249, -inf
  %253 = vmax.xlane.f32.xlu0 %v252
  %v254 = vpop.xlane.xlu0 %253
  %v255 = vsel %vm251, %v250, -inf
  %256 = vmax.xlane.f32.xlu0 %v255
  %v257 = vpop.xlane.xlu0 %256
  %v258 = vsub.f32 %v249, %v254
  %v259 = vsub.f32 %v250, %v257
  %v260 = vmul.f32 %v258, 1.442695
  %v261 = vpow.pop %v260
  %v262 = vmul.f32 %v259, 1.442695
  %v263 = vpow.pop %v262
  %v264 = vsel %vm251, %v261, 0.0
  %265 = vadd.xlane.f32.xlu0 %v264
  %v266 = vpop.xlane.xlu0 %265
  %v267 = vsel %vm251, %v263, 0.0
  %268 = vadd.xlane.f32.xlu0 %v267
  %v269 = vpop.xlane.xlu0 %268
  %v270 = vrcp.pop %v266
  %v271 = vrcp.pop %v269
  %v272 = vmul.f32 %v261, %v270
  %v273 = vmul.f32 %v263, %v271
  %274 = vrot.lane.b32.xlu0 %v148, 64
  %v275 = vpop.permute.xlu0 %274
  %276 = vrot.lane.b32.xlu0 %v153, 64
  %v277 = vpop.permute.xlu0 %276
  %v281 = vsel %vm251, %v272, 0
  %v284 = vsel %vm251, %v273, 0
  %286 = vmatprep.subr.mxu0 0.0
  %287 = vmatpush1.msra.mxu0 0.0
  %288 = vmatprep.subr.mxu0 0.0
  %289 = vmatpush1.msra.mxu0 0.0
  %290 = vmatprep.subr.mxu0 0.0
  %291 = vmatpush1.msra.mxu0 0.0
  %292 = vmatprep.subr.mxu0 0.0
  %293 = vmatpush1.msra.mxu0 0.0
  %294 = vmatprep.subr.mxu0 0.0
  %295 = vmatpush1.msra.mxu0 0.0
  %296 = vmatprep.subr.mxu0 0.0
  %297 = vmatpush1.msra.mxu0 0.0
  %298 = vmatprep.subr.mxu0 0.0
  %299 = vmatpush1.msra.mxu0 0.0
  %300 = vmatprep.subr.mxu0 0.0
  %301 = vmatpush1.msra.mxu0 0.0
  %302 = vmatprep.subr.mxu0 0.0
  %303 = vmatpush1.msra.mxu0 0.0
  %304 = vmatprep.subr.mxu0 0.0
  %305 = vmatpush1.msra.mxu0 0.0
  %306 = vmatprep.subr.mxu0 0.0
  %307 = vmatpush1.msra.mxu0 0.0
  %308 = vmatprep.subr.mxu0 0.0
  %309 = vmatpush1.msra.mxu0 0.0
  %310 = vmatprep.subr.mxu0 0.0
  %311 = vmatpush1.msra.mxu0 0.0
  %312 = vmatprep.subr.mxu0 0.0
  %313 = vmatpush1.msra.mxu0 0.0
  %314 = vmatprep.subr.mxu0 0.0
  %315 = vmatpush1.msra.mxu0 %v277
  %316 = vmatprep.subr.mxu0 0.0
  %317 = vmatpush1.msra.mxu0 %v275
  %318 = vmatprep.subr.mxu0 0.0
  %319 = vmatpush2.msra.mxu0 0.0
  %320 = vmatprep.subr.mxu0 0.0
  %321 = vmatpush2.msra.mxu0 0.0
  %322 = vmatprep.subr.mxu0 0.0
  %323 = vmatpush2.msra.mxu0 0.0
  %324 = vmatprep.subr.mxu0 0.0
  %325 = vmatpush2.msra.mxu0 0.0
  %326 = vmatprep.subr.mxu0 0.0
  %327 = vmatpush2.msra.mxu0 0.0
  %328 = vmatprep.subr.mxu0 0.0
  %329 = vmatpush2.msra.mxu0 0.0
  %330 = vmatprep.subr.mxu0 0.0
  %331 = vmatpush2.msra.mxu0 0.0
  %332 = vmatprep.subr.mxu0 0.0
  %333 = vmatpush2.msra.mxu0 0.0
  %334 = vmatprep.subr.mxu0 0.0
  %335 = vmatpush2.msra.mxu0 0.0
  %336 = vmatprep.subr.mxu0 0.0
  %337 = vmatpush2.msra.mxu0 0.0
  %338 = vmatprep.subr.mxu0 0.0
  %339 = vmatpush2.msra.mxu0 0.0
  %340 = vmatprep.subr.mxu0 0.0
  %341 = vmatpush2.msra.mxu0 0.0
  %342 = vmatprep.subr.mxu0 0.0
  %343 = vmatpush2.msra.mxu0 0.0
  %344 = vmatprep.subr.mxu0 0.0
  %345 = vmatpush2.msra.mxu0 0.0
  %346 = vmatprep.subr.mxu0 0.0
  %347 = vmatpush2.msra.mxu0 0.0
  %348 = vmatprep.subr.mxu0 0.0
  %349 = vmatpush2.msra.mxu0 0.0
  %350 = vmatprep.mubr.f32.mxu0 0.0
  %351 = vmatmul.mubr.f32.gmra.mxu0 %v281
  %v352 = vpop.f32.mrf.mxu0
  %v353 = vadd.f32 0.0, %v352
  %v354 = vpop.f32.mrf.mxu0
  %355 = vmatprep.mubr.f32.mxu0 0.0
  %356 = vmatmul.mubr.f32.gmra.mxu0 %v284
  %v357 = vpop.f32.mrf.mxu0
  %v358 = vadd.f32 0.0, %v357
  %v359 = vpop.f32.mrf.mxu0
  %360 = vdwg.mxu0
  %v361 = vlaneseq
  %v362 = vshrl.u32 %v361, 7
  %v363 = vsub.s32 3, %v362
  %v364 = vrot.slane %v23, %v363
  %369 = vrot.lane.b32.xlu0 %v67, 32
  %v370 = vpop.permute.xlu0 %369
  %371 = vrot.lane.b32.xlu0 %v68, 32
  %v372 = vpop.permute.xlu0 %371
  %373 = vrot.lane.b32.xlu0 %v69, 32
  %v374 = vpop.permute.xlu0 %373
  %375 = vrot.lane.b32.xlu0 %v70, 32
  %v376 = vpop.permute.xlu0 %375
  %v382 = vsel %vm27, %v353, 0
  %v385 = vsel %vm27, %v358, 0
  %387 = vmatprep.subr.mxu0 0.0
  %388 = vmatpush1.msra.mxu0 0.0
  %389 = vmatprep.subr.mxu0 0.0
  %390 = vmatpush1.msra.mxu0 0.0
  %391 = vmatprep.subr.mxu0 0.0
  %392 = vmatpush1.msra.mxu0 0.0
  %393 = vmatprep.subr.mxu0 0.0
  %394 = vmatpush1.msra.mxu0 0.0
  %395 = vmatprep.subr.mxu0 0.0
  %396 = vmatpush1.msra.mxu0 0.0
  %397 = vmatprep.subr.mxu0 0.0
  %398 = vmatpush1.msra.mxu0 0.0
  %399 = vmatprep.subr.mxu0 0.0
  %400 = vmatpush1.msra.mxu0 0.0
  %401 = vmatprep.subr.mxu0 0.0
  %402 = vmatpush1.msra.mxu0 0.0
  %403 = vmatprep.subr.mxu0 0.0
  %404 = vmatpush1.msra.mxu0 0.0
  %405 = vmatprep.subr.mxu0 0.0
  %406 = vmatpush1.msra.mxu0 0.0
  %407 = vmatprep.subr.mxu0 0.0
  %408 = vmatpush1.msra.mxu0 0.0
  %409 = vmatprep.subr.mxu0 0.0
  %410 = vmatpush1.msra.mxu0 0.0
  %411 = vmatprep.subr.mxu0 0.0
  %412 = vmatpush1.msra.mxu0 %v376
  %413 = vmatprep.subr.mxu0 0.0
  %414 = vmatpush1.msra.mxu0 %v374
  %415 = vmatprep.subr.mxu0 0.0
  %416 = vmatpush1.msra.mxu0 %v372
  %417 = vmatprep.subr.mxu0 0.0
  %418 = vmatpush1.msra.mxu0 %v370
  %419 = vmatprep.subr.mxu0 0.0
  %420 = vmatpush2.msra.mxu0 0.0
  %421 = vmatprep.subr.mxu0 0.0
  %422 = vmatpush2.msra.mxu0 0.0
  %423 = vmatprep.subr.mxu0 0.0
  %424 = vmatpush2.msra.mxu0 0.0
  %425 = vmatprep.subr.mxu0 0.0
  %426 = vmatpush2.msra.mxu0 0.0
  %427 = vmatprep.subr.mxu0 0.0
  %428 = vmatpush2.msra.mxu0 0.0
  %429 = vmatprep.subr.mxu0 0.0
  %430 = vmatpush2.msra.mxu0 0.0
  %431 = vmatprep.subr.mxu0 0.0
  %432 = vmatpush2.msra.mxu0 0.0
  %433 = vmatprep.subr.mxu0 0.0
  %434 = vmatpush2.msra.mxu0 0.0
  %435 = vmatprep.subr.mxu0 0.0
  %436 = vmatpush2.msra.mxu0 0.0
  %437 = vmatprep.subr.mxu0 0.0
  %438 = vmatpush2.msra.mxu0 0.0
  %439 = vmatprep.subr.mxu0 0.0
  %440 = vmatpush2.msra.mxu0 0.0
  %441 = vmatprep.subr.mxu0 0.0
  %442 = vmatpush2.msra.mxu0 0.0
  %443 = vmatprep.subr.mxu0 0.0
  %444 = vmatpush2.msra.mxu0 0.0
  %445 = vmatprep.subr.mxu0 0.0
  %446 = vmatpush2.msra.mxu0 0.0
  %447 = vmatprep.subr.mxu0 0.0
  %448 = vmatpush2.msra.mxu0 0.0
  %449 = vmatprep.subr.mxu0 0.0
  %450 = vmatpush2.msra.mxu0 0.0
  %451 = vmatprep.mubr.f32.mxu0 0.0
  %452 = vmatmul.mubr.f32.gmra.mxu0 %v382
  %v453 = vpop.f32.mrf.mxu0
  %v454 = vadd.f32 %v364, %v453
  %v455 = vpop.f32.mrf.mxu0
  %456 = vmatprep.mubr.f32.mxu0 0.0
  %457 = vmatmul.mubr.f32.gmra.mxu0 %v385
  %v458 = vpop.f32.mrf.mxu0
  %v459 = vadd.f32 %v364, %v458
  %v460 = vpop.f32.mrf.mxu0
  %461 = vdwg.mxu0
  %v462 = vadd.f32 %v65, %v454
  %v463 = vadd.f32 %v66, %v459
  %v464 = vsel %vm27, %v462, 0.0
  %465 = vadd.xlane.f32.xlu0 %v464
  %v466 = vpop.xlane.xlu0 %465
  %v467 = vsel %vm27, %v463, 0.0
  %468 = vadd.xlane.f32.xlu0 %v467
  %v469 = vpop.xlane.xlu0 %468
  %v470 = vmul.f32 %v466, %v34
  %v471 = vmul.f32 %v469, %v34
  %v472 = vsub.f32 %v462, %v470
  %v473 = vsub.f32 %v463, %v471
  %v474 = vmul.f32 %v472, %v472
  %v475 = vmul.f32 %v473, %v473
  %v476 = vsel %vm27, %v474, 0.0
  %477 = vadd.xlane.f32.xlu0 %v476
  %v478 = vpop.xlane.xlu0 %477
  %v479 = vsel %vm27, %v475, 0.0
  %480 = vadd.xlane.f32.xlu0 %v479
  %v481 = vpop.xlane.xlu0 %480
  %v482 = vmul.f32 %v478, %v34
  %v483 = vmul.f32 %v481, %v34
  %v484 = vadd.f32 %v482, 1e-12
  %v485 = vadd.f32 %v483, 1e-12
  %v486 = vrsqrt.pop %v484
  %v487 = vrsqrt.pop %v485
  %v488 = vmul.f32 %v472, %v486
  %v489 = vmul.f32 %v473, %v487
  %v490 = vlaneseq
  %v491 = vshrl.u32 %v490, 7
  %v492 = vsub.s32 4, %v491
  %v493 = vrot.slane %v23, %v492
  %v494 = vmul.f32 %v488, %v493
  %v495 = vmul.f32 %v489, %v493
  %v496 = vlaneseq
  %v497 = vshrl.u32 %v496, 7
  %v498 = vsub.s32 5, %v497
  %v499 = vrot.slane %v23, %v498
  %v500 = vadd.f32 %v494, %v499
  %v501 = vadd.f32 %v495, %v499
  %v502 = vld [vmem:[%s2 + $0x10] sm:$0xff]
  %v503 = vld [vmem:[%s2 + $0x28] sm:$0xff]
  %v504 = vld [vmem:[%s2 + $0x40] sm:$0xff]
  %v505 = vld [vmem:[%s2 + $0x58] sm:$0xff]
  %v506 = vlaneseq
  %v507 = vshrl.u32 %v506, 7
  %v508 = vsub.s32 6, %v507
  %v509 = vrot.slane %v23, %v508
  %v511 = vsel %vm27, %v500, 0
  %v514 = vsel %vm27, %v501, 0
  %516 = vmatprep.subr.mxu0 0.0
  %517 = vmatpush1.msra.mxu0 0.0
  %518 = vmatprep.subr.mxu0 0.0
  %519 = vmatpush1.msra.mxu0 0.0
  %520 = vmatprep.subr.mxu0 0.0
  %521 = vmatpush1.msra.mxu0 0.0
  %522 = vmatprep.subr.mxu0 0.0
  %523 = vmatpush1.msra.mxu0 0.0
  %524 = vmatprep.subr.mxu0 0.0
  %525 = vmatpush1.msra.mxu0 0.0
  %526 = vmatprep.subr.mxu0 0.0
  %527 = vmatpush1.msra.mxu0 0.0
  %528 = vmatprep.subr.mxu0 0.0
  %529 = vmatpush1.msra.mxu0 0.0
  %530 = vmatprep.subr.mxu0 0.0
  %531 = vmatpush1.msra.mxu0 0.0
  %532 = vmatprep.subr.mxu0 0.0
  %533 = vmatpush1.msra.mxu0 0.0
  %534 = vmatprep.subr.mxu0 0.0
  %535 = vmatpush1.msra.mxu0 0.0
  %536 = vmatprep.subr.mxu0 0.0
  %537 = vmatpush1.msra.mxu0 0.0
  %538 = vmatprep.subr.mxu0 0.0
  %539 = vmatpush1.msra.mxu0 0.0
  %540 = vmatprep.subr.mxu0 0.0
  %541 = vmatpush1.msra.mxu0 %v505
  %542 = vmatprep.subr.mxu0 0.0
  %543 = vmatpush1.msra.mxu0 %v504
  %544 = vmatprep.subr.mxu0 0.0
  %545 = vmatpush1.msra.mxu0 %v503
  %546 = vmatprep.subr.mxu0 0.0
  %547 = vmatpush1.msra.mxu0 %v502
  %548 = vmatprep.subr.mxu0 0.0
  %549 = vmatpush2.msra.mxu0 0.0
  %550 = vmatprep.subr.mxu0 0.0
  %551 = vmatpush2.msra.mxu0 0.0
  %552 = vmatprep.subr.mxu0 0.0
  %553 = vmatpush2.msra.mxu0 0.0
  %554 = vmatprep.subr.mxu0 0.0
  %555 = vmatpush2.msra.mxu0 0.0
  %556 = vmatprep.subr.mxu0 0.0
  %557 = vmatpush2.msra.mxu0 0.0
  %558 = vmatprep.subr.mxu0 0.0
  %559 = vmatpush2.msra.mxu0 0.0
  %560 = vmatprep.subr.mxu0 0.0
  %561 = vmatpush2.msra.mxu0 0.0
  %562 = vmatprep.subr.mxu0 0.0
  %563 = vmatpush2.msra.mxu0 0.0
  %564 = vmatprep.subr.mxu0 0.0
  %565 = vmatpush2.msra.mxu0 0.0
  %566 = vmatprep.subr.mxu0 0.0
  %567 = vmatpush2.msra.mxu0 0.0
  %568 = vmatprep.subr.mxu0 0.0
  %569 = vmatpush2.msra.mxu0 0.0
  %570 = vmatprep.subr.mxu0 0.0
  %571 = vmatpush2.msra.mxu0 0.0
  %572 = vmatprep.subr.mxu0 0.0
  %573 = vmatpush2.msra.mxu0 0.0
  %574 = vmatprep.subr.mxu0 0.0
  %575 = vmatpush2.msra.mxu0 0.0
  %576 = vmatprep.subr.mxu0 0.0
  %577 = vmatpush2.msra.mxu0 0.0
  %578 = vmatprep.subr.mxu0 0.0
  %579 = vmatpush2.msra.mxu0 0.0
  %580 = vmatprep.mubr.f32.mxu0 0.0
  %581 = vmatmul.mubr.f32.gmra.mxu0 %v511
  %v582 = vpop.f32.mrf.mxu0
  %v583 = vadd.f32 %v509, %v582
  %v584 = vpop.f32.mrf.mxu0
  %585 = vmatprep.mubr.f32.mxu0 0.0
  %586 = vmatmul.mubr.f32.gmra.mxu0 %v514
  %v587 = vpop.f32.mrf.mxu0
  %v588 = vadd.f32 %v509, %v587
  %v589 = vpop.f32.mrf.mxu0
  %590 = vdwg.mxu0
  %v591 = vmul.f32 %v583, 0.5
  %v592 = vmul.f32 %v588, 0.5
  %v593 = vmul.f32 %v583, 0.044715
  %v594 = vmul.f32 %v588, 0.044715
  %v595 = vmul.f32 %v593, %v583
  %v596 = vmul.f32 %v594, %v588
  %v597 = vmul.f32 %v595, %v583
  %v598 = vmul.f32 %v596, %v588
  %v599 = vadd.f32 %v583, %v597
  %v600 = vadd.f32 %v588, %v598
  %v601 = vmul.f32 %v599, 0.7978846
  %v602 = vmul.f32 %v600, 0.7978846
  %v603 = vtanh.pop %v601
  %v604 = vtanh.pop %v602
  %v605 = vadd.f32 %v603, 1.0
  %v606 = vadd.f32 %v604, 1.0
  %v607 = vmul.f32 %v591, %v605
  %v608 = vmul.f32 %v592, %v606
  %v609 = vld [vmem:[%s3 + $0x8] sm:$0xff]
  %v610 = vld [vmem:[%s3 + $0x18] sm:$0xff]
  %v611 = vld [vmem:[%s3 + $0x28] sm:$0xff]
  %v612 = vld [vmem:[%s3 + $0x38] sm:$0xff]
  %v613 = vld [vmem:[%s3 + $0x48] sm:$0xff]
  %v614 = vld [vmem:[%s3 + $0x58] sm:$0xff]
  %v615 = vld [vmem:[%s3 + $0x68] sm:$0xff]
  %v616 = vld [vmem:[%s3 + $0x78] sm:$0xff]
  %v617 = vlaneseq
  %v618 = vshrl.u32 %v617, 7
  %v619 = vsub.s32 7, %v618
  %v620 = vrot.slane %v23, %v619
  %vm621 = vcmask 523264
  %v623 = vsel %vm621, %v607, 0
  %v626 = vsel %vm621, %v608, 0
  %628 = vmatprep.subr.mxu0 0.0
  %629 = vmatpush1.msra.mxu0 0.0
  %630 = vmatprep.subr.mxu0 0.0
  %631 = vmatpush1.msra.mxu0 0.0
  %632 = vmatprep.subr.mxu0 0.0
  %633 = vmatpush1.msra.mxu0 0.0
  %634 = vmatprep.subr.mxu0 0.0
  %635 = vmatpush1.msra.mxu0 0.0
  %636 = vmatprep.subr.mxu0 0.0
  %637 = vmatpush1.msra.mxu0 0.0
  %638 = vmatprep.subr.mxu0 0.0
  %639 = vmatpush1.msra.mxu0 0.0
  %640 = vmatprep.subr.mxu0 0.0
  %641 = vmatpush1.msra.mxu0 0.0
  %642 = vmatprep.subr.mxu0 0.0
  %643 = vmatpush1.msra.mxu0 0.0
  %644 = vmatprep.subr.mxu0 0.0
  %645 = vmatpush1.msra.mxu0 %v616
  %646 = vmatprep.subr.mxu0 0.0
  %647 = vmatpush1.msra.mxu0 %v615
  %648 = vmatprep.subr.mxu0 0.0
  %649 = vmatpush1.msra.mxu0 %v614
  %650 = vmatprep.subr.mxu0 0.0
  %651 = vmatpush1.msra.mxu0 %v613
  %652 = vmatprep.subr.mxu0 0.0
  %653 = vmatpush1.msra.mxu0 %v612
  %654 = vmatprep.subr.mxu0 0.0
  %655 = vmatpush1.msra.mxu0 %v611
  %656 = vmatprep.subr.mxu0 0.0
  %657 = vmatpush1.msra.mxu0 %v610
  %658 = vmatprep.subr.mxu0 0.0
  %659 = vmatpush1.msra.mxu0 %v609
  %660 = vmatprep.subr.mxu0 0.0
  %661 = vmatpush2.msra.mxu0 0.0
  %662 = vmatprep.subr.mxu0 0.0
  %663 = vmatpush2.msra.mxu0 0.0
  %664 = vmatprep.subr.mxu0 0.0
  %665 = vmatpush2.msra.mxu0 0.0
  %666 = vmatprep.subr.mxu0 0.0
  %667 = vmatpush2.msra.mxu0 0.0
  %668 = vmatprep.subr.mxu0 0.0
  %669 = vmatpush2.msra.mxu0 0.0
  %670 = vmatprep.subr.mxu0 0.0
  %671 = vmatpush2.msra.mxu0 0.0
  %672 = vmatprep.subr.mxu0 0.0
  %673 = vmatpush2.msra.mxu0 0.0
  %674 = vmatprep.subr.mxu0 0.0
  %675 = vmatpush2.msra.mxu0 0.0
  %676 = vmatprep.subr.mxu0 0.0
  %677 = vmatpush2.msra.mxu0 0.0
  %678 = vmatprep.subr.mxu0 0.0
  %679 = vmatpush2.msra.mxu0 0.0
  %680 = vmatprep.subr.mxu0 0.0
  %681 = vmatpush2.msra.mxu0 0.0
  %682 = vmatprep.subr.mxu0 0.0
  %683 = vmatpush2.msra.mxu0 0.0
  %684 = vmatprep.subr.mxu0 0.0
  %685 = vmatpush2.msra.mxu0 0.0
  %686 = vmatprep.subr.mxu0 0.0
  %687 = vmatpush2.msra.mxu0 0.0
  %688 = vmatprep.subr.mxu0 0.0
  %689 = vmatpush2.msra.mxu0 0.0
  %690 = vmatprep.subr.mxu0 0.0
  %691 = vmatpush2.msra.mxu0 0.0
  %692 = vmatprep.mubr.f32.mxu0 0.0
  %693 = vmatmul.mubr.f32.gmra.mxu0 %v623
  %v694 = vpop.f32.mrf.mxu0
  %v695 = vadd.f32 %v620, %v694
  %v696 = vpop.f32.mrf.mxu0
  %697 = vmatprep.mubr.f32.mxu0 0.0
  %698 = vmatmul.mubr.f32.gmra.mxu0 %v626
  %v699 = vpop.f32.mrf.mxu0
  %v700 = vadd.f32 %v620, %v699
  %v701 = vpop.f32.mrf.mxu0
  %702 = vdwg.mxu0
  %v703 = vadd.f32 %v500, %v695
  %v704 = vadd.f32 %v501, %v700
  %v705 = vsel %vm27, %v703, 0.0
  %706 = vadd.xlane.f32.xlu0 %v705
  %v707 = vpop.xlane.xlu0 %706
  %v708 = vsel %vm27, %v704, 0.0
  %709 = vadd.xlane.f32.xlu0 %v708
  %v710 = vpop.xlane.xlu0 %709
  %v711 = vmul.f32 %v707, %v34
  %v712 = vmul.f32 %v710, %v34
  %v713 = vsub.f32 %v703, %v711
  %v714 = vsub.f32 %v704, %v712
  %v715 = vmul.f32 %v713, %v713
  %v716 = vmul.f32 %v714, %v714
  %v717 = vsel %vm27, %v715, 0.0
  %718 = vadd.xlane.f32.xlu0 %v717
  %v719 = vpop.xlane.xlu0 %718
  %v720 = vsel %vm27, %v716, 0.0
  %721 = vadd.xlane.f32.xlu0 %v720
  %v722 = vpop.xlane.xlu0 %721
  %v723 = vmul.f32 %v719, %v34
  %v724 = vmul.f32 %v722, %v34
  %v725 = vadd.f32 %v723, 1e-12
  %v726 = vadd.f32 %v724, 1e-12
  %v727 = vrsqrt.pop %v725
  %v728 = vrsqrt.pop %v726
  %v729 = vmul.f32 %v713, %v727
  %v730 = vmul.f32 %v714, %v728
  %v731 = vlaneseq
  %v732 = vshrl.u32 %v731, 7
  %v733 = vsub.s32 0, %v732
  %v734 = vrot.slane %v24, %v733
  %v735 = vmul.f32 %v729, %v734
  %v736 = vmul.f32 %v730, %v734
  %v737 = vlaneseq
  %v738 = vshrl.u32 %v737, 7
  %v739 = vsub.s32 1, %v738
  %v740 = vrot.slane %v24, %v739
  %v741 = vadd.f32 %v735, %v740
  %v742 = vadd.f32 %v736, %v740
  %v743 = vld [vmem:[%s2 + $0x8] sm:$0xff]
  %v744 = vld [vmem:[%s2 + $0x20] sm:$0xff]
  %v745 = vld [vmem:[%s2 + $0x38] sm:$0xff]
  %v746 = vld [vmem:[%s2 + $0x50] sm:$0xff]
  %v747 = vlaneseq
  %v748 = vshrl.u32 %v747, 7
  %v749 = vsub.s32 2, %v748
  %v750 = vrot.slane %v24, %v749
  %v752 = vsel %vm27, %v741, 0
  %v755 = vsel %vm27, %v742, 0
  %757 = vmatprep.subr.mxu0 0.0
  %758 = vmatpush1.msra.mxu0 0.0
  %759 = vmatprep.subr.mxu0 0.0
  %760 = vmatpush1.msra.mxu0 0.0
  %761 = vmatprep.subr.mxu0 0.0
  %762 = vmatpush1.msra.mxu0 0.0
  %763 = vmatprep.subr.mxu0 0.0
  %764 = vmatpush1.msra.mxu0 0.0
  %765 = vmatprep.subr.mxu0 0.0
  %766 = vmatpush1.msra.mxu0 0.0
  %767 = vmatprep.subr.mxu0 0.0
  %768 = vmatpush1.msra.mxu0 0.0
  %769 = vmatprep.subr.mxu0 0.0
  %770 = vmatpush1.msra.mxu0 0.0
  %771 = vmatprep.subr.mxu0 0.0
  %772 = vmatpush1.msra.mxu0 0.0
  %773 = vmatprep.subr.mxu0 0.0
  %774 = vmatpush1.msra.mxu0 0.0
  %775 = vmatprep.subr.mxu0 0.0
  %776 = vmatpush1.msra.mxu0 0.0
  %777 = vmatprep.subr.mxu0 0.0
  %778 = vmatpush1.msra.mxu0 0.0
  %779 = vmatprep.subr.mxu0 0.0
  %780 = vmatpush1.msra.mxu0 0.0
  %781 = vmatprep.subr.mxu0 0.0
  %782 = vmatpush1.msra.mxu0 %v746
  %783 = vmatprep.subr.mxu0 0.0
  %784 = vmatpush1.msra.mxu0 %v745
  %785 = vmatprep.subr.mxu0 0.0
  %786 = vmatpush1.msra.mxu0 %v744
  %787 = vmatprep.subr.mxu0 0.0
  %788 = vmatpush1.msra.mxu0 %v743
  %789 = vmatprep.subr.mxu0 0.0
  %790 = vmatpush2.msra.mxu0 0.0
  %791 = vmatprep.subr.mxu0 0.0
  %792 = vmatpush2.msra.mxu0 0.0
  %793 = vmatprep.subr.mxu0 0.0
  %794 = vmatpush2.msra.mxu0 0.0
  %795 = vmatprep.subr.mxu0 0.0
  %796 = vmatpush2.msra.mxu0 0.0
  %797 = vmatprep.subr.mxu0 0.0
  %798 = vmatpush2.msra.mxu0 0.0
  %799 = vmatprep.subr.mxu0 0.0
  %800 = vmatpush2.msra.mxu0 0.0
  %801 = vmatprep.subr.mxu0 0.0
  %802 = vmatpush2.msra.mxu0 0.0
  %803 = vmatprep.subr.mxu0 0.0
  %804 = vmatpush2.msra.mxu0 0.0
  %805 = vmatprep.subr.mxu0 0.0
  %806 = vmatpush2.msra.mxu0 0.0
  %807 = vmatprep.subr.mxu0 0.0
  %808 = vmatpush2.msra.mxu0 0.0
  %809 = vmatprep.subr.mxu0 0.0
  %810 = vmatpush2.msra.mxu0 0.0
  %811 = vmatprep.subr.mxu0 0.0
  %812 = vmatpush2.msra.mxu0 0.0
  %813 = vmatprep.subr.mxu0 0.0
  %814 = vmatpush2.msra.mxu0 0.0
  %815 = vmatprep.subr.mxu0 0.0
  %816 = vmatpush2.msra.mxu0 0.0
  %817 = vmatprep.subr.mxu0 0.0
  %818 = vmatpush2.msra.mxu0 0.0
  %819 = vmatprep.subr.mxu0 0.0
  %820 = vmatpush2.msra.mxu0 0.0
  %821 = vmatprep.mubr.f32.mxu0 0.0
  %822 = vmatmul.mubr.f32.gmra.mxu0 %v752
  %v823 = vpop.f32.mrf.mxu0
  %v824 = vadd.f32 %v750, %v823
  %v825 = vpop.f32.mrf.mxu0
  %826 = vmatprep.mubr.f32.mxu0 0.0
  %827 = vmatmul.mubr.f32.gmra.mxu0 %v755
  %v828 = vpop.f32.mrf.mxu0
  %v829 = vadd.f32 %v750, %v828
  %v830 = vpop.f32.mrf.mxu0
  %831 = vdwg.mxu0
  %v832 = vmax.f32 %v824, 0.0
  %v833 = vmax.f32 %v829, 0.0
  %v834 = vld [vmem:[%s4] sm:$0xff]
  %v835 = vld [vmem:[%s4 + $0x8] sm:$0xff]
  %v836 = vld [vmem:[%s4 + $0x10] sm:$0xff]
  %v837 = vld [vmem:[%s4 + $0x18] sm:$0xff]
  %v838 = vld [vmem:[%s4 + $0x20] sm:$0xff]
  %v839 = vld [vmem:[%s4 + $0x28] sm:$0xff]
  %v840 = vld [vmem:[%s4 + $0x30] sm:$0xff]
  %v841 = vld [vmem:[%s4 + $0x38] sm:$0xff]
  %v842 = vld [vmem:[%s4 + $0x40] sm:$0xff]
  %v843 = vld [vmem:[%s4 + $0x48] sm:$0xff]
  %v844 = vld [vmem:[%s4 + $0x50] sm:$0xff]
  %v845 = vld [vmem:[%s4 + $0x58] sm:$0xff]
  %v846 = vld [vmem:[%s4 + $0x60] sm:$0xff]
  %v847 = vld [vmem:[%s4 + $0x68] sm:$0xff]
  %v848 = vld [vmem:[%s4 + $0x70] sm:$0xff]
  %v849 = vld [vmem:[%s4 + $0x78] sm:$0xff]
  %v850 = vlaneseq
  %v851 = vshrl.u32 %v850, 7
  %v852 = vsub.s32 3, %v851
  %v853 = vrot.slane %v24, %v852
  %854 = vmatprep.subr.mxu0 0.0
  %855 = vmatpush1.msra.mxu0 %v849
  %856 = vmatprep.subr.mxu0 0.0
  %857 = vmatpush1.msra.mxu0 %v848
  %858 = vmatprep.subr.mxu0 0.0
  %859 = vmatpush1.msra.mxu0 %v847
  %860 = vmatprep.subr.mxu0 0.0
  %861 = vmatpush1.msra.mxu0 %v846
  %862 = vmatprep.subr.mxu0 0.0
  %863 = vmatpush1.msra.mxu0 %v845
  %864 = vmatprep.subr.mxu0 0.0
  %865 = vmatpush1.msra.mxu0 %v844
  %866 = vmatprep.subr.mxu0 0.0
  %867 = vmatpush1.msra.mxu0 %v843
  %868 = vmatprep.subr.mxu0 0.0
  %869 = vmatpush1.msra.mxu0 %v842
  %870 = vmatprep.subr.mxu0 0.0
  %871 = vmatpush1.msra.mxu0 %v841
  %872 = vmatprep.subr.mxu0 0.0
  %873 = vmatpush1.msra.mxu0 %v840
  %874 = vmatprep.subr.mxu0 0.0
  %875 = vmatpush1.msra.mxu0 %v839
  %876 = vmatprep.subr.mxu0 0.0
  %877 = vmatpush1.msra.mxu0 %v838
  %878 = vmatprep.subr.mxu0 0.0
  %879 = vmatpush1.msra.mxu0 %v837
  %880 = vmatprep.subr.mxu0 0.0
  %881 = vmatpush1.msra.mxu0 %v836
  %882 = vmatprep.subr.mxu0 0.0
  %883 = vmatpush1.msra.mxu0 %v835
  %884 = vmatprep.subr.mxu0 0.0
  %885 = vmatpush1.msra.mxu0 %v834
  %886 = vmatprep.subr.mxu0 0.0
  %887 = vmatpush2.msra.mxu0 0.0
  %888 = vmatprep.subr.mxu0 0.0
  %889 = vmatpush2.msra.mxu0 0.0
  %890 = vmatprep.subr.mxu0 0.0
  %891 = vmatpush2.msra.mxu0 0.0
  %892 = vmatprep.subr.mxu0 0.0
  %893 = vmatpush2.msra.mxu0 0.0
  %894 = vmatprep.subr.mxu0 0.0
  %895 = vmatpush2.msra.mxu0 0.0
  %896 = vmatprep.subr.mxu0 0.0
  %897 = vmatpush2.msra.mxu0 0.0
  %898 = vmatprep.subr.mxu0 0.0
  %899 = vmatpush2.msra.mxu0 0.0
  %900 = vmatprep.subr.mxu0 0.0
  %901 = vmatpush2.msra.mxu0 0.0
  %902 = vmatprep.subr.mxu0 0.0
  %903 = vmatpush2.msra.mxu0 0.0
  %904 = vmatprep.subr.mxu0 0.0
  %905 = vmatpush2.msra.mxu0 0.0
  %906 = vmatprep.subr.mxu0 0.0
  %907 = vmatpush2.msra.mxu0 0.0
  %908 = vmatprep.subr.mxu0 0.0
  %909 = vmatpush2.msra.mxu0 0.0
  %910 = vmatprep.subr.mxu0 0.0
  %911 = vmatpush2.msra.mxu0 0.0
  %912 = vmatprep.subr.mxu0 0.0
  %913 = vmatpush2.msra.mxu0 0.0
  %914 = vmatprep.subr.mxu0 0.0
  %915 = vmatpush2.msra.mxu0 0.0
  %916 = vmatprep.subr.mxu0 0.0
  %917 = vmatpush2.msra.mxu0 0.0
  %918 = vmatprep.mubr.f32.mxu0 0.0
  %919 = vmatmul.mubr.f32.gmra.mxu0 %v832
  %v920 = vpop.f32.mrf.mxu0
  %v921 = vadd.f32 %v853, %v920
  %v922 = vpop.f32.mrf.mxu0
  %923 = vmatprep.mubr.f32.mxu0 0.0
  %924 = vmatmul.mubr.f32.gmra.mxu0 %v833
  %v925 = vpop.f32.mrf.mxu0
  %v926 = vadd.f32 %v853, %v925
  %v927 = vpop.f32.mrf.mxu0
  %928 = vdwg.mxu0
  %v929 = vmax.f32 %v921, 0.0
  %v930 = vmax.f32 %v926, 0.0
  %v931 = vld [vmem:[%s3] sm:$0xff]
  %v932 = vld [vmem:[%s3 + $0x10] sm:$0xff]
  %v933 = vld [vmem:[%s3 + $0x20] sm:$0xff]
  %v934 = vld [vmem:[%s3 + $0x30] sm:$0xff]
  %v935 = vld [vmem:[%s3 + $0x40] sm:$0xff]
  %v936 = vld [vmem:[%s3 + $0x50] sm:$0xff]
  %v937 = vld [vmem:[%s3 + $0x60] sm:$0xff]
  %v938 = vld [vmem:[%s3 + $0x70] sm:$0xff]
  %v939 = vlaneseq
  %v940 = vshrl.u32 %v939, 7
  %v941 = vsub.s32 4, %v940
  %v942 = vrot.slane %v24, %v941
  %v944 = vsel %vm621, %v929, 0
  %v947 = vsel %vm621, %v930, 0
  %949 = vmatprep.subr.mxu0 0.0
  %950 = vmatpush1.msra.mxu0 0.0
  %951 = vmatprep.subr.mxu0 0.0
  %952 = vmatpush1.msra.mxu0 0.0
  %953 = vmatprep.subr.mxu0 0.0
  %954 = vmatpush1.msra.mxu0 0.0
  %955 = vmatprep.subr.mxu0 0.0
  %956 = vmatpush1.msra.mxu0 0.0
  %957 = vmatprep.subr.mxu0 0.0
  %958 = vmatpush1.msra.mxu0 0.0
  %959 = vmatprep.subr.mxu0 0.0
  %960 = vmatpush1.msra.mxu0 0.0
  %961 = vmatprep.subr.mxu0 0.0
  %962 = vmatpush1.msra.mxu0 0.0
  %963 = vmatprep.subr.mxu0 0.0
  %964 = vmatpush1.msra.mxu0 0.0
  %965 = vmatprep.subr.mxu0 0.0
  %966 = vmatpush1.msra.mxu0 %v938
  %967 = vmatprep.subr.mxu0 0.0
  %968 = vmatpush1.msra.mxu0 %v937
  %969 = vmatprep.subr.mxu0 0.0
  %970 = vmatpush1.msra.mxu0 %v936
  %971 = vmatprep.subr.mxu0 0.0
  %972 = vmatpush1.msra.mxu0 %v935
  %973 = vmatprep.subr.mxu0 0.0
  %974 = vmatpush1.msra.mxu0 %v934
  %975 = vmatprep.subr.mxu0 0.0
  %976 = vmatpush1.msra.mxu0 %v933
  %977 = vmatprep.subr.mxu0 0.0
  %978 = vmatpush1.msra.mxu0 %v932
  %979 = vmatprep.subr.mxu0 0.0
  %980 = vmatpush1.msra.mxu0 %v931
  %981 = vmatprep.subr.mxu0 0.0
  %982 = vmatpush2.msra.mxu0 0.0
  %983 = vmatprep.subr.mxu0 0.0
  %984 = vmatpush2.msra.mxu0 0.0
  %985 = vmatprep.subr.mxu0 0.0
  %986 = vmatpush2.msra.mxu0 0.0
  %987 = vmatprep.subr.mxu0 0.0
  %988 = vmatpush2.msra.mxu0 0.0
  %989 = vmatprep.subr.mxu0 0.0
  %990 = vmatpush2.msra.mxu0 0.0
  %991 = vmatprep.subr.mxu0 0.0
  %992 = vmatpush2.msra.mxu0 0.0
  %993 = vmatprep.subr.mxu0 0.0
  %994 = vmatpush2.msra.mxu0 0.0
  %995 = vmatprep.subr.mxu0 0.0
  %996 = vmatpush2.msra.mxu0 0.0
  %997 = vmatprep.subr.mxu0 0.0
  %998 = vmatpush2.msra.mxu0 0.0
  %999 = vmatprep.subr.mxu0 0.0
  %1000 = vmatpush2.msra.mxu0 0.0
  %1001 = vmatprep.subr.mxu0 0.0
  %1002 = vmatpush2.msra.mxu0 0.0
  %1003 = vmatprep.subr.mxu0 0.0
  %1004 = vmatpush2.msra.mxu0 0.0
  %1005 = vmatprep.subr.mxu0 0.0
  %1006 = vmatpush2.msra.mxu0 0.0
  %1007 = vmatprep.subr.mxu0 0.0
  %1008 = vmatpush2.msra.mxu0 0.0
  %1009 = vmatprep.subr.mxu0 0.0
  %1010 = vmatpush2.msra.mxu0 0.0
  %1011 = vmatprep.subr.mxu0 0.0
  %1012 = vmatpush2.msra.mxu0 0.0
  %1013 = vmatprep.mubr.f32.mxu0 0.0
  %1014 = vmatmul.mubr.f32.gmra.mxu0 %v944
  %v1015 = vpop.f32.mrf.mxu0
  %v1016 = vadd.f32 %v942, %v1015
  %v1017 = vpop.f32.mrf.mxu0
  %1018 = vmatprep.mubr.f32.mxu0 0.0
  %1019 = vmatmul.mubr.f32.gmra.mxu0 %v947
  %v1020 = vpop.f32.mrf.mxu0
  %v1021 = vadd.f32 %v942, %v1020
  %v1022 = vpop.f32.mrf.mxu0
  %1023 = vdwg.mxu0
  %1024 = vst [vmem:[%s6] sm:$0xff] %v1016
  %1025 = vst [vmem:[%s6 + $0x8] sm:$0xff] %v1021
  // Predicated region
  $region26: #{peft_mlp_classifier_forward.1} parent=0 // pred_check
    _
  $region27: #{peft_mlp_classifier_forward.1} parent=0 // pred_check_branch
    %1027 = sbr.rel (0) target = $region29
  $region28: #{peft_mlp_classifier_forward.1} parent=0 // pred_region
    _
  $region29: #{peft_mlp_classifier_forward.1} parent=0 // pred_fallthru
    _
  // Predicated region
  $region30: #{peft_mlp_classifier_forward.1} parent=0 // pred_check
    _
  $region31: #{peft_mlp_classifier_forward.1} parent=0 // pred_check_branch
    %1029 = sbr.rel (0) target = $region33
  $region32: #{peft_mlp_classifier_forward.1} parent=0 // pred_region
    _
  $region33: #{peft_mlp_classifier_forward.1} parent=0 // pred_fallthru
    _

</llo_original>
